<compile_context>
chip_gen: v5e
topology: v5e:2x2
jax: 0.10.0
libtpu: 0.0.40
codegen_flags: <defaults>
</compile_context>

<pallas_src>
import functools

import jax
import jax.numpy as jnp
from jax import lax
from jax.experimental import pallas as pl
from jax.experimental.pallas import tpu as pltpu

LANES = 128
SUBLANES = 8
CHUNK_ROWS = 512                      # in-kernel compute/accumulate granularity
BLOCK_BYTES = 4 * 1024 * 1024         # ~4 MiB per input block per grid step
VMEM_LIMIT_BYTES = 32 * 1024 * 1024   # 2 inputs x 2 buffers x 4 MiB + headroom


def _round_up(x, m):
    return ((x + m - 1) // m) * m


def _detect_num_tensorcores():
    """Best-effort TensorCore count: v7x has 2, v5e/v6e have 1. Default 1."""
    try:
        kind = jax.devices()[0].device_kind.lower()
    except Exception:
        return 1
    return 2 if "v7" in kind else 1


_NUM_TC = _detect_num_tensorcores()


def _sq_diff_partial_kernel(yhat_ref, y_ref, out_ref, acc_ref, *,
                            rows, tile_rows, chunk_rows, steps_per_split):
    c = pl.program_id(0)          # split (maps to a TensorCore on v7x)
    j = pl.program_id(1)          # sequential reduction step within the split

    @pl.when(j == 0)
    def _init():
        acc_ref[...] = jnp.zeros_like(acc_ref)

    # Unclamped global row offset of this step's block. For split 1's clamped
    # duplicate block (odd block counts) row0 >= rows, so every chunk below
    # takes the masked path and contributes exactly zero. The mask always uses
    # this unclamped offset while the data comes from the clamped block index.
    row0 = (c * steps_per_split + j) * tile_rows
    n_chunks = tile_rows // chunk_rows

    @pl.loop(0, n_chunks)
    def _chunk(ci):
        r = pl.multiple_of(ci * chunk_rows, chunk_rows)
        chunk_row0 = row0 + r
        full = chunk_row0 + chunk_rows <= rows

        # Hot path: fully valid chunk -> plain sub/square/accumulate.
        # No iota, no compare, no select.
        @pl.when(full)
        def _():
            d = (yhat_ref[pl.ds(r, chunk_rows), :].astype(jnp.float32)
                 - y_ref[pl.ds(r, chunk_rows), :].astype(jnp.float32))
            acc_ref[...] += d * d

        # Cold path: only the single ragged edge chunk of the array and the
        # (fully invalid) chunks of a clamped duplicate block pay for masking.
        @pl.when(jnp.logical_not(full))
        def _():
            d = (yhat_ref[pl.ds(r, chunk_rows), :].astype(jnp.float32)
                 - y_ref[pl.ds(r, chunk_rows), :].astype(jnp.float32))
            row_ids = chunk_row0 + lax.broadcasted_iota(
                jnp.int32, (chunk_rows, LANES), 0)
            d = jnp.where(row_ids < rows, d, jnp.float32(0.0))
            acc_ref[...] += d * d

    @pl.when(j == pl.num_programs(1) - 1)
    def _finalize():
        out_ref[0] = acc_ref[...]


def _partial_sq_sum(yhat2d, y2d):
    """Sum((yhat2d - y2d)^2) over a (rows, 128) lane-dense view."""
    rows = yhat2d.shape[0]
    itemsize = max(jnp.dtype(yhat2d.dtype).itemsize,
                   jnp.dtype(y2d.dtype).itemsize)
    # ~BLOCK_BYTES per input block per grid step, dtype-adaptive row count
    # (bf16 doubles the rows so bytes/block — and roofline fraction — is kept).
    target_rows = max(CHUNK_ROWS, BLOCK_BYTES // (LANES * itemsize))
    if rows >= target_rows:
        tile_rows = target_rows
        chunk_rows = CHUNK_ROWS
    else:
        tile_rows = _round_up(rows, SUBLANES)
        chunk_rows = min(CHUNK_ROWS, tile_rows)
        tile_rows = _round_up(tile_rows, chunk_rows)

    nblocks = pl.cdiv(rows, tile_rows)
    # Only split the reduction when the chip actually has >1 TensorCore (v7x);
    # on v5e/v6e a 2-way split is a serial loop plus wasted duplicate DMA.
    num_splits = _NUM_TC if (_NUM_TC > 1 and nblocks >= _NUM_TC) else 1
    steps = pl.cdiv(nblocks, num_splits)

    def in_index_map(c, j):
        b = c * steps + j
        # Clamp: with an odd block count, split 1's last step has no real
        # block; it re-reads the last block and the in-kernel mask zeroes it.
        return (jnp.minimum(b, nblocks - 1), 0)

    kernel = functools.partial(
        _sq_diff_partial_kernel,
        rows=rows, tile_rows=tile_rows, chunk_rows=chunk_rows,
        steps_per_split=steps)

    n_main = rows * LANES
    in_bytes = n_main * (jnp.dtype(yhat2d.dtype).itemsize
                         + jnp.dtype(y2d.dtype).itemsize)
    cost = pl.CostEstimate(flops=3 * n_main, transcendentals=0,
                           bytes_accessed=in_bytes)

    if num_splits > 1:
        # v7x: shard the split axis across the two TensorCores.
        split_sem = getattr(pltpu, "CORE_PARALLEL", pltpu.PARALLEL)
    else:
        split_sem = pltpu.ARBITRARY

    partials = pl.pallas_call(
        kernel,
        out_shape=jax.ShapeDtypeStruct((num_splits, chunk_rows, LANES),
                                       jnp.float32),
        grid_spec=pltpu.PrefetchScalarGridSpec(
            num_scalar_prefetch=0,
            grid=(num_splits, steps),
            in_specs=[
                pl.BlockSpec((tile_rows, LANES), in_index_map),
                pl.BlockSpec((tile_rows, LANES), in_index_map),
            ],
            out_specs=pl.BlockSpec((1, chunk_rows, LANES),
                                   lambda c, j: (c, 0, 0)),
            scratch_shapes=[pltpu.VMEM((chunk_rows, LANES), jnp.float32)],
        ),
        compiler_params=pltpu.CompilerParams(
            dimension_semantics=(split_sem, pltpu.ARBITRARY),
            vmem_limit_bytes=VMEM_LIMIT_BYTES,
            allow_input_fusion=[True, True],
        ),
        cost_estimate=cost,
    )(yhat2d, y2d)

    # Tiny (num_splits, chunk_rows, 128) final reduce fuses into the epilogue.
    return jnp.sum(partials, dtype=jnp.float32)


@functools.partial(jax.jit, static_argnames=("eps",))
def rmse_loss(yhat, y, eps=1e-6):
    """Pallas equivalent of RMSELoss().forward(yhat, y)."""
    # yhat.view(y.shape): only the element count matters — the loss is an
    # elementwise reduction over the flattened tensors.
    assert yhat.size == y.size, "yhat must be reshapeable to y.shape"
    n = y.size
    if n == 0:
        # NOTE: PyTorch's MSELoss on empty tensors yields NaN; we return
        # sqrt(eps) instead of dividing by zero (intentional divergence).
        return jnp.sqrt(jnp.float32(eps))

    yh = yhat.reshape(-1)
    yt = y.reshape(-1)

    # Kernel consumes the 128-aligned prefix as a (rows, 128) lane-dense view
    # (metadata-only reshape when n % 128 == 0, the common case); the <128
    # element tail is reduced in plain JAX.
    n_main = (n // LANES) * LANES
    total = jnp.float32(0.0)

    if n_main:
        if n_main == n:
            yh_m, yt_m = yh, yt
        else:
            # Rare ragged case; allow_input_fusion lets XLA fuse this slice
            # into the kernel inputs instead of materializing an HBM copy.
            yh_m, yt_m = yh[:n_main], yt[:n_main]
        total = total + _partial_sq_sum(
            yh_m.reshape(n_main // LANES, LANES),
            yt_m.reshape(n_main // LANES, LANES))

    if n_main != n:
        td = yh[n_main:].astype(jnp.float32) - yt[n_main:].astype(jnp.float32)
        total = total + jnp.sum(td * td)

    mse = total / jnp.float32(n)
    return jnp.sqrt(mse + jnp.float32(eps))


if __name__ == "__main__":
    key = jax.random.PRNGKey(0)

    def ref_rmse(yhat, y, eps=1e-6):
        d = yhat.reshape(y.shape).astype(jnp.float32) - y.astype(jnp.float32)
        return jnp.sqrt(jnp.mean(d * d) + eps)

    # 1) Module-shaped small case: yhat arrives flattened, y carries the target
    #    shape (exercises .view(y.shape) semantics). n = 2048 -> aligned path.
    k1, k2 = jax.random.split(key)
    y1 = jax.random.normal(k1, (2, 4, 16, 16), dtype=jnp.float32)
    yhat1 = jax.random.normal(k2, (2, 4 * 16 * 16), dtype=jnp.float32)
    out1 = rmse_loss(yhat1, y1)
    jax.block_until_ready(out1)
    assert jnp.allclose(out1, ref_rmse(yhat1, y1), rtol=1e-5, atol=1e-6), \
        (out1, ref_rmse(yhat1, y1))

    # 2) Unaligned size (n % 128 != 0): masked edge chunk + plain-JAX tail.
    k3, k4 = jax.random.split(k2)
    y2 = jax.random.normal(k3, (5, 1000), dtype=jnp.float32)
    yhat2 = jax.random.normal(k4, (5000,), dtype=jnp.float32)
    out2 = rmse_loss(yhat2, y2)
    jax.block_until_ready(out2)
    assert jnp.allclose(out2, ref_rmse(yhat2, y2), rtol=1e-5, atol=1e-6), \
        (out2, ref_rmse(yhat2, y2))

    # 3) Multi-block case with a partial last block: exercises multi-step
    #    accumulation, the hoisted full/masked chunk paths, and (on v7x) the
    #    2-way TensorCore split with a clamped duplicate block.
    k5, k6 = jax.random.split(k4)
    rows3 = 2 * 8192 + 1000
    y3 = jax.random.normal(k5, (rows3, LANES), dtype=jnp.float32)
    yhat3 = jax.random.normal(k6, (rows3 * LANES,), dtype=jnp.float32)
    out3 = rmse_loss(yhat3, y3)
    jax.block_until_ready(out3)
    assert jnp.allclose(out3, ref_rmse(yhat3, y3), rtol=1e-4, atol=1e-6), \
        (out3, ref_rmse(yhat3, y3))

    # 4) bf16 inputs: exercises dtype-adaptive tiling and f32 accumulation.
    k7, k8 = jax.random.split(k6)
    y4 = jax.random.normal(k7, (4, 8, 32), dtype=jnp.bfloat16)
    yhat4 = jax.random.normal(k8, (4 * 8 * 32,), dtype=jnp.bfloat16)
    out4 = rmse_loss(yhat4, y4)
    jax.block_until_ready(out4)
    assert jnp.allclose(out4, ref_rmse(yhat4, y4), rtol=1e-5, atol=1e-6), \
        (out4, ref_rmse(yhat4, y4))

    print("KERNEL_OK")
</pallas_src>

<mosaic_0001>
module attributes {stable_mosaic.version = 11 : i64} {
  func.func @_sq_diff_partial_kernel(%arg0: i32, %arg1: i32, %arg2: memref<16x128xf32, #tpu.memory_space<vmem>>, %arg3: memref<16x128xf32, #tpu.memory_space<vmem>>, %arg4: memref<1x16x128xf32, #tpu.memory_space<vmem>>, %arg5: memref<16x128xf32, #tpu.memory_space<vmem>>) attributes {dimension_semantics = [#tpu.dimension_semantics<arbitrary>, #tpu.dimension_semantics<arbitrary>], iteration_bounds = array<i64: 1, 1>, scalar_prefetch = 0 : i64, scratch_operands = 1 : i64, tpu.core_type = #tpu.core_type<tc>, window_params = [{transform_indices = @transform_0, window_bounds = array<i64: 16, 128>}, {transform_indices = @transform_1, window_bounds = array<i64: 16, 128>}, {transform_indices = @transform_2, window_bounds = array<i64: 1, 16, 128>}]} {
    %c0_i32 = arith.constant 0 : i32
    %0 = arith.cmpi eq, %arg1, %c0_i32 : i32
    %1 = arith.extui %0 : i1 to i32
    %c0_i32_0 = arith.constant 0 : i32
    %2 = arith.cmpi ne, %1, %c0_i32_0 : i32
    scf.if %2 {
      %cst = arith.constant 0.000000e+00 : f32
      %21 = vector.broadcast %cst : f32 to vector<16x128xf32>
      %c0 = arith.constant 0 : index
      %c0_12 = arith.constant 0 : index
      %22 = vector.load %arg5[%c0, %c0_12] : memref<16x128xf32, #tpu.memory_space<vmem>>, vector<16x128xf32>
      tpu.vector_store %arg5[%c0, %c0_12], %21 {strides = array<i32>} : memref<16x128xf32, #tpu.memory_space<vmem>>, vector<16x128xf32>,
    } else {
    }
    %c1_i32 = arith.constant 1 : i32
    %3 = arith.muli %arg0, %c1_i32 : i32
    %4 = arith.addi %3, %arg1 : i32
    %c16_i32 = arith.constant 16 : i32
    %5 = arith.muli %4, %c16_i32 : i32
    %c0_i32_1 = arith.constant 0 : i32
    %c1_i32_2 = arith.constant 1 : i32
    %6 = arith.muli %c0_i32_1, %c1_i32_2 : i32
    %c0_i32_3 = arith.constant 0 : i32
    %7 = arith.addi %c0_i32_3, %6 : i32
    %c16_i32_4 = arith.constant 16 : i32
    %8 = arith.muli %7, %c16_i32_4 : i32
    %9 = tpu.assume_multiple %8, 16 : i32
    %10 = arith.addi %5, %9 : i32
    %c16_i32_5 = arith.constant 16 : i32
    %11 = arith.addi %10, %c16_i32_5 : i32
    %c16_i32_6 = arith.constant 16 : i32
    %12 = arith.cmpi sle, %11, %c16_i32_6 : i32
    %13 = arith.extui %12 : i1 to i32
    %c0_i32_7 = arith.constant 0 : i32
    %14 = arith.cmpi ne, %13, %c0_i32_7 : i32
    scf.if %14 {
      %21 = arith.index_cast %9 : i32 to index
      %c0 = arith.constant 0 : index
      %22 = vector.load %arg2[%21, %c0] : memref<16x128xf32, #tpu.memory_space<vmem>>, vector<16x128xf32>
      %23 = arith.index_cast %9 : i32 to index
      %c0_12 = arith.constant 0 : index
      %24 = vector.load %arg3[%23, %c0_12] : memref<16x128xf32, #tpu.memory_space<vmem>>, vector<16x128xf32>
      %25 = arith.subf %22, %24 : vector<16x128xf32>
      %c0_13 = arith.constant 0 : index
      %c0_14 = arith.constant 0 : index
      %26 = vector.load %arg5[%c0_13, %c0_14] : memref<16x128xf32, #tpu.memory_space<vmem>>, vector<16x128xf32>
      %27 = arith.mulf %25, %25 : vector<16x128xf32>
      %28 = arith.addf %26, %27 : vector<16x128xf32>
      %c0_15 = arith.constant 0 : index
      %c0_16 = arith.constant 0 : index
      %29 = vector.load %arg5[%c0_15, %c0_16] : memref<16x128xf32, #tpu.memory_space<vmem>>, vector<16x128xf32>
      tpu.vector_store %arg5[%c0_15, %c0_16], %28 {strides = array<i32>} : memref<16x128xf32, #tpu.memory_space<vmem>>, vector<16x128xf32>,
    } else {
    }
    %true = arith.constant true
    %15 = arith.xori %12, %true : i1
    %16 = arith.extui %15 : i1 to i32
    %c0_i32_8 = arith.constant 0 : i32
    %17 = arith.cmpi ne, %16, %c0_i32_8 : i32
    scf.if %17 {
      %21 = arith.index_cast %9 : i32 to index
      %c0 = arith.constant 0 : index
      %22 = vector.load %arg2[%21, %c0] : memref<16x128xf32, #tpu.memory_space<vmem>>, vector<16x128xf32>
      %23 = arith.index_cast %9 : i32 to index
      %c0_12 = arith.constant 0 : index
      %24 = vector.load %arg3[%23, %c0_12] : memref<16x128xf32, #tpu.memory_space<vmem>>, vector<16x128xf32>
      %25 = arith.subf %22, %24 : vector<16x128xf32>
      %26 = tpu.iota {dimensions = array<i32: 0>} : vector<16x128xi32>
      %27 = vector.broadcast %10 : i32 to vector<16x128xi32>
      %28 = arith.addi %27, %26 : vector<16x128xi32>
      %c16_i32_13 = arith.constant 16 : i32
      %29 = vector.broadcast %c16_i32_13 : i32 to vector<16x128xi32>
      %30 = arith.cmpi slt, %28, %29 : vector<16x128xi32>
      %cst = arith.constant 0.000000e+00 : f32
      %31 = vector.broadcast %cst : f32 to vector<16x128xf32>
      %32 = arith.select %30, %25, %31 : vector<16x128xi1>, vector<16x128xf32>
      %c0_14 = arith.constant 0 : index
      %c0_15 = arith.constant 0 : index
      %33 = vector.load %arg5[%c0_14, %c0_15] : memref<16x128xf32, #tpu.memory_space<vmem>>, vector<16x128xf32>
      %34 = arith.mulf %32, %32 : vector<16x128xf32>
      %35 = arith.addf %33, %34 : vector<16x128xf32>
      %c0_16 = arith.constant 0 : index
      %c0_17 = arith.constant 0 : index
      %36 = vector.load %arg5[%c0_16, %c0_17] : memref<16x128xf32, #tpu.memory_space<vmem>>, vector<16x128xf32>
      tpu.vector_store %arg5[%c0_16, %c0_17], %35 {strides = array<i32>} : memref<16x128xf32, #tpu.memory_space<vmem>>, vector<16x128xf32>,
    } else {
    }
    %c1_i32_9 = arith.constant 1 : i32
    %c0_i32_10 = arith.constant 0 : i32
    %18 = arith.cmpi eq, %arg1, %c0_i32_10 : i32
    %19 = arith.extui %18 : i1 to i32
    %c0_i32_11 = arith.constant 0 : i32
    %20 = arith.cmpi ne, %19, %c0_i32_11 : i32
    scf.if %20 {
      %c0 = arith.constant 0 : index
      %c0_12 = arith.constant 0 : index
      %21 = vector.load %arg5[%c0, %c0_12] : memref<16x128xf32, #tpu.memory_space<vmem>>, vector<16x128xf32>
      %c0_13 = arith.constant 0 : index
      %c0_14 = arith.constant 0 : index
      %c0_15 = arith.constant 0 : index
      %22 = vector.load %arg4[%c0_13, %c0_14, %c0_15] : memref<1x16x128xf32, #tpu.memory_space<vmem>>, vector<1x16x128xf32>
      %23 = vector.shape_cast %22 : vector<1x16x128xf32> to vector<16x128xf32>
      %24 = vector.shape_cast %21 : vector<16x128xf32> to vector<1x16x128xf32>
      tpu.vector_store %arg4[%c0_13, %c0_14, %c0_15], %24 {strides = array<i32>} : memref<1x16x128xf32, #tpu.memory_space<vmem>>, vector<1x16x128xf32>,
    } else {
    }
    return
  }
  func.func @transform_0(%arg0: i32, %arg1: i32) -> (i32, i32) {
    %c1_i32 = arith.constant 1 : i32
    %0 = arith.muli %arg0, %c1_i32 : i32
    %1 = arith.addi %0, %arg1 : i32
    %c0_i32 = arith.constant 0 : i32
    %2 = arith.minsi %1, %c0_i32 : i32
    %c0_i32_0 = arith.constant 0 : i32
    %c0_i32_1 = arith.constant 0 : i32
    return %2, %c0_i32_0 : i32, i32
  }
  func.func @transform_1(%arg0: i32, %arg1: i32) -> (i32, i32) {
    %c1_i32 = arith.constant 1 : i32
    %0 = arith.muli %arg0, %c1_i32 : i32
    %1 = arith.addi %0, %arg1 : i32
    %c0_i32 = arith.constant 0 : i32
    %2 = arith.minsi %1, %c0_i32 : i32
    %c0_i32_0 = arith.constant 0 : i32
    %c0_i32_1 = arith.constant 0 : i32
    return %2, %c0_i32_0 : i32, i32
  }
  func.func @transform_2(%arg0: i32, %arg1: i32) -> (i32, i32, i32) {
    %c0_i32 = arith.constant 0 : i32
    %c0_i32_0 = arith.constant 0 : i32
    %c0_i32_1 = arith.constant 0 : i32
    return %arg0, %c0_i32, %c0_i32_0 : i32, i32, i32
  }
}

</mosaic_0001>

<llo_original>
// kernel: rmse_loss.1
$region0: #{rmse_loss.1}
  #allocation0 [shape = 'u32[]', space=smem, size = 0x4, offset = 0x4, fixed_abs, tag = 'smem constant byte address 0x4 - core index']
  #allocation1 [shape = 'u32[72,128]{1,0:T(1,128)}', space=vmem, size = 0x9000, scoped, tag = 'internal scratch']
  #allocation2 [shape = 'f32[16,128]{1,0:T(8,128)}', space=vmem, size = 0x2000, scoped, tag = 'scratch operand']
  %s0 = inlined_call_operand.vmem [shape: f32[16,128], index: 0, kind: input, shape index: {}]
  %s1 = inlined_call_operand.vmem [shape: f32[16,128], index: 1, kind: input, shape index: {}]
  %s2 = inlined_call_operand.vmem [shape: f32[1,16,128], index: 2, kind: output, shape index: {}]
  %s3 = sld [smem:[#allocation0]]
  $region34: #{rmse_loss.1} parent=0
    _
  %s5 = ssub.s32 1, %s3
  %s6 = scalar_select 0, %s5, %s3
  // Predicated region
  $region2: #{rmse_loss.1} parent=0 // pred_check
    _
  $region3: #{rmse_loss.1} parent=0 // pred_check_branch
    %8 = sbr.rel (0) target = $region5
  $region4: #{rmse_loss.1} parent=0 // pred_region
    %s9 = sadd.s32 0, 0
    %p10 = scmp.lt.s32.totalorder %s9, 0
    %s11 = scalar_select %p10, %s9, 0
    %s12 = smul.u32 2, %s11
    %p13 = scmp.lt.s32.totalorder %s12, 1
    %s14 = scalar_select %p13, %s12, 1
    %s15 = smul.addr %s14, 8
    %s16 = scalar_lea.vmem %s0, %s15
    %s17 = sadd.s32 0, 0
    %p18 = scmp.lt.s32.totalorder %s17, 0
    %s19 = scalar_select %p18, %s17, 0
    %s20 = smul.u32 2, %s19
  $region5: #{rmse_loss.1} parent=0 // pred_fallthru
    _
  // Predicated region
  $region6: #{rmse_loss.1} parent=0 // pred_check
    _
  $region7: #{rmse_loss.1} parent=0 // pred_check_branch
    %22 = sbr.rel (0) target = $region9
  $region8: #{rmse_loss.1} parent=0 // pred_region
    %s23 = sadd.s32 0, 0
    %p24 = scmp.lt.s32.totalorder %s23, 0
    %s25 = scalar_select %p24, %s23, 0
    %s26 = smul.u32 2, %s25
    %p27 = scmp.lt.s32.totalorder %s26, 1
    %s28 = scalar_select %p27, %s26, 1
    %s29 = smul.addr %s28, 8
    %s30 = scalar_lea.vmem %s1, %s29
    %s31 = sadd.s32 0, 0
    %p32 = scmp.lt.s32.totalorder %s31, 0
    %s33 = scalar_select %p32, %s31, 0
    %s34 = smul.u32 2, %s33
  $region9: #{rmse_loss.1} parent=0 // pred_fallthru
    _
  %s35 = sadd.s32 0, 0
  %p36 = scmp.lt.s32.totalorder %s35, 0
  %s37 = scalar_select %p36, %s35, 0
  %s38 = smul.u32 2, %s37
  %p39 = scmp.lt.s32.totalorder %s38, 1
  %s40 = scalar_select %p39, %s38, 1
  %s41 = smul.addr %s40, 8
  %s42 = scalar_lea.vmem %s0, %s41
  %s43 = sadd.s32 0, 0
  %p44 = scmp.lt.s32.totalorder %s43, 0
  %s45 = scalar_select %p44, %s43, 0
  %s46 = smul.u32 2, %s45
  %p47 = scmp.lt.s32.totalorder %s46, 1
  %s48 = scalar_select %p47, %s46, 1
  %s49 = smul.addr %s48, 8
  %s50 = scalar_lea.vmem %s1, %s49
  %s51 = sadd.s32 0, 0
  %p52 = scmp.lt.s32.totalorder %s51, 0
  %s53 = scalar_select %p52, %s51, 0
  %s54 = smul.u32 2, %s53
  %p55 = scmp.lt.s32.totalorder %s54, 1
  %s56 = scalar_select %p55, %s54, 1
  %s57 = smul.addr %s56, 8
  %s58 = scalar_lea.vmem %s0, %s57
  %s59 = sadd.s32 0, 0
  %p60 = scmp.lt.s32.totalorder %s59, 0
  %s61 = scalar_select %p60, %s59, 0
  %s62 = smul.u32 2, %s61
  %s63 = sadd.s32 0, 0
  %p64 = scmp.lt.s32.totalorder %s63, 0
  %s65 = scalar_select %p64, %s63, 0
  %s66 = smul.u32 2, %s65
  %p67 = scmp.lt.s32.totalorder %s66, 1
  %s68 = scalar_select %p67, %s66, 1
  %s69 = smul.addr %s68, 8
  %s70 = scalar_lea.vmem %s1, %s69
  %s71 = sadd.s32 0, 0
  %p72 = scmp.lt.s32.totalorder %s71, 0
  %s73 = scalar_select %p72, %s71, 0
  %s74 = smul.u32 2, %s73
  %p75 = scmp.eq.s32.totalorder 0, 0
  // Predicated region
  $region10: #{rmse_loss.1} parent=0 // pred_check
    %p76 = pneg %p75
  $region11: #{rmse_loss.1} parent=0 // pred_check_branch
    %78 = sbr.rel (%p76) target = $region13
  $region12: #{rmse_loss.1} parent=0 // pred_region
    %79 = vst [vmem:[#allocation2] sm:$0xff] 0.0
    %80 = vst [vmem:[#allocation2 + $0x8] sm:$0xff] 0.0
  $region13: #{rmse_loss.1} parent=0 // pred_fallthru
    _
  %s81 = sadd.s32 0, 0
  %s82 = smul.u32 %s81, 16
  %s83 = sadd.s32 %s82, 0
  %s84 = sadd.s32 %s83, 16
  %p85 = scmp.le.s32.totalorder %s84, 16
  // Predicated region
  $region14: #{rmse_loss.1} parent=0 // pred_check
    %p86 = pneg %p85
  $region15: #{rmse_loss.1} parent=0 // pred_check_branch
    %88 = sbr.rel (%p86) target = $region17
  $region16: #{rmse_loss.1} parent=0 // pred_region
    %v89 = vld [vmem:[%s58] sm:$0xff]
    %v90 = vld [vmem:[%s58 + $0x8] sm:$0xff]
    %v91 = vld [vmem:[%s70] sm:$0xff]
    %v92 = vld [vmem:[%s70 + $0x8] sm:$0xff]
    %v93 = vsub.f32 %v89, %v91
    %v94 = vsub.f32 %v90, %v92
    %v95 = vld [vmem:[#allocation2] sm:$0xff]
    %v96 = vld [vmem:[#allocation2 + $0x8] sm:$0xff]
    %v97 = vmul.f32 %v93, %v93
    %v98 = vmul.f32 %v94, %v94
    %v99 = vadd.f32 %v95, %v97
    %v100 = vadd.f32 %v96, %v98
    %101 = vst [vmem:[#allocation2] sm:$0xff] %v99
    %102 = vst [vmem:[#allocation2 + $0x8] sm:$0xff] %v100
  $region17: #{rmse_loss.1} parent=0 // pred_fallthru
    _
  %p103 = scmp.gt.s32.totalorder %s84, 16
  // Predicated region
  $region18: #{rmse_loss.1} parent=0 // pred_check
    %p104 = pneg %p103
  $region19: #{rmse_loss.1} parent=0 // pred_check_branch
    %106 = sbr.rel (%p104) target = $region21
  $region20: #{rmse_loss.1} parent=0 // pred_region
    %v107 = vld [vmem:[%s58] sm:$0xff]
    %v108 = vld [vmem:[%s58 + $0x8] sm:$0xff]
    %v109 = vld [vmem:[%s70] sm:$0xff]
    %v110 = vld [vmem:[%s70 + $0x8] sm:$0xff]
    %v111 = vsub.f32 %v107, %v109
    %v112 = vsub.f32 %v108, %v110
    %v113 = vlaneseq
    %v114 = vshrl.u32 %v113, 7
    %v115 = vadd.s32 %v114, 8
    %v116 = vstv %s83
    %v117 = vadd.s32 %v116, %v114
    %v118 = vadd.s32 %v116, %v115
    %vm119 = vcmp.lt.s32.totalorder %v117, 16
    %vm120 = vcmp.lt.s32.totalorder %v118, 16
    %v121 = vsel %vm119, %v111, 0.0
    %v122 = vsel %vm120, %v112, 0.0
    %v123 = vld [vmem:[#allocation2] sm:$0xff]
    %v124 = vld [vmem:[#allocation2 + $0x8] sm:$0xff]
    %v125 = vmul.f32 %v121, %v121
    %v126 = vmul.f32 %v122, %v122
    %v127 = vadd.f32 %v123, %v125
    %v128 = vadd.f32 %v124, %v126
    %129 = vst [vmem:[#allocation2] sm:$0xff] %v127
    %130 = vst [vmem:[#allocation2 + $0x8] sm:$0xff] %v128
  $region21: #{rmse_loss.1} parent=0 // pred_fallthru
    _
  // Predicated region
  $region22: #{rmse_loss.1} parent=0 // pred_check
    %p131 = pneg %p75
  $region23: #{rmse_loss.1} parent=0 // pred_check_branch
    %133 = sbr.rel (%p131) target = $region25
  $region24: #{rmse_loss.1} parent=0 // pred_region
    %v134 = vld [vmem:[#allocation2] sm:$0xff]
    %v135 = vld [vmem:[#allocation2 + $0x8] sm:$0xff]
    %136 = vst [vmem:[%s2] sm:$0xff] %v134
    %137 = vst [vmem:[%s2 + $0x8] sm:$0xff] %v135
  $region25: #{rmse_loss.1} parent=0 // pred_fallthru
    _
  // Predicated region
  $region26: #{rmse_loss.1} parent=0 // pred_check
    _
  $region27: #{rmse_loss.1} parent=0 // pred_check_branch
    %139 = sbr.rel (0) target = $region29
  $region28: #{rmse_loss.1} parent=0 // pred_region
    _
  $region29: #{rmse_loss.1} parent=0 // pred_fallthru
    _
  // Predicated region
  $region30: #{rmse_loss.1} parent=0 // pred_check
    _
  $region31: #{rmse_loss.1} parent=0 // pred_check_branch
    %141 = sbr.rel (0) target = $region33
  $region32: #{rmse_loss.1} parent=0 // pred_region
    _
  $region33: #{rmse_loss.1} parent=0 // pred_fallthru
    _

</llo_original>
